<compile_context>
chip_gen: v5e
topology: v5e:2x2
jax: 0.10.0
libtpu: 0.0.40
codegen_flags: <defaults>
</compile_context>

<pallas_src>
import functools

import jax
import jax.numpy as jnp
from jax.experimental import pallas as pl
from jax.experimental.pallas import tpu as pltpu


# ----------------------------------------------------------------------------
# Kernel
# ----------------------------------------------------------------------------
def _make_attr_adapter_kernel(hidden_sizes, hyper_offsets, eps=1e-5,
                              final_relu=True):
    """hidden_sizes: per-layer output width H_i.
       hyper_offsets: lane offset of layer i's gating slice in the fused
       hypernet output (N, sum_H)."""
    L = len(hidden_sizes)

    def kernel(ctrl_ref, attr_ref, w_hyper_ref, vec_ref, *rest):
        wa_refs = rest[:L]          # per-layer adapter weights (D_prev, H_i)
        out_ref = rest[L]

        vecs = vec_ref[...]         # (num_vecs, H_max) f32 packed small vectors

        # Entire HyperNet in ONE MXU matmul.  ctrl_ref rows are the control
        # signal augmented with a ones column (so the hyper biases are folded
        # into the matmul) and repeated per attribute row -> (N, sum_H).
        hw_all = jnp.dot(ctrl_ref[...], w_hyper_ref[...],
                         preferred_element_type=jnp.float32)

        x = attr_ref[...]           # (N, D_in), compute dtype
        for i, h in enumerate(hidden_sizes):
            wa = wa_refs[i][...]                       # (D_prev, H_i)
            ba = vecs[i:i + 1, :h]                     # (1, H_i) adapter bias
            off = hyper_offsets[i]

            # AdapterLayer_i linear (MXU, f32 accumulate) + per-sample gate.
            y = jnp.dot(x.astype(wa.dtype), wa,
                        preferred_element_type=jnp.float32) + ba       # (N, H_i)
            x = y * hw_all[:, off:off + h]                             # (N, H_i)

            if i < L - 1:
                g = vecs[L + i:L + i + 1, :h]              # LN gamma
                b = vecs[2 * L - 1 + i:2 * L + i, :h]      # LN beta
                # Single-pass LayerNorm statistics (one fewer XLU reduce).
                inv_h = 1.0 / h
                mean = jnp.sum(x, axis=-1, keepdims=True) * inv_h
                ex2 = jnp.sum(x * x, axis=-1, keepdims=True) * inv_h
                var = ex2 - mean * mean
                x = (x - mean) * jax.lax.rsqrt(var + eps)
                x = x * g + b
                x = jnp.maximum(x, 0.0)
                # TODO(synk): nn.Dropout() is eval-mode identity (no RNG mask).

        if final_relu:
            x = jnp.maximum(x, 0.0)
        out_ref[...] = x.astype(out_ref.dtype)

    return kernel


# ----------------------------------------------------------------------------
# One-time parameter packing (PyTorch layout -> kernel layout)
# ----------------------------------------------------------------------------
def prepare_attr_adapter_params(params, hypernet_struct, *, relu=True,
                                compute_dtype=jnp.float32):
    keys = list(hypernet_struct.keys())
    L = len(keys)
    h_sizes = [int(hypernet_struct[k][1]) for k in keys]
    h_max = max(h_sizes)

    # Fused hypernet weight: concat W_i^T along the output dim, append the
    # bias row (consumed through a ones-column on the control signal).
    w_cat = jnp.concatenate([params[f"hyper_{k}_w"].T for k in keys], axis=1)
    b_cat = jnp.concatenate([params[f"hyper_{k}_b"] for k in keys])[None, :]
    w_hyper_aug = jnp.concatenate([w_cat, b_cat], axis=0).astype(compute_dtype)

    # Adapter weights, pre-transposed to (D_prev, H_i).
    wa_list = tuple(params[f"adapter_{i}_w"].T.astype(compute_dtype)
                    for i in range(L))

    # Pack every small (H,) vector into ONE (num_vecs, H_max) f32 slab:
    #   rows [0, L)       : adapter biases
    #   rows [L, 2L-1)    : LayerNorm gammas
    #   rows [2L-1, 3L-2) : LayerNorm betas
    def row(v):
        v = v.astype(jnp.float32)
        return jnp.pad(v, (0, h_max - v.shape[0]))[None, :]

    rows = [row(params[f"adapter_{i}_b"]) for i in range(L)]
    rows += [row(params[f"ln_{i}_g"]) for i in range(L - 1)]
    rows += [row(params[f"ln_{i}_b"]) for i in range(L - 1)]
    vec_pack = jnp.concatenate(rows, axis=0)

    return {"w_hyper_aug": w_hyper_aug, "vec_pack": vec_pack,
            "wa_list": wa_list, "relu": relu}


# ----------------------------------------------------------------------------
# Forward (jitted wrapper: layout plumbing only, compute lives in the kernel)
# ----------------------------------------------------------------------------
@functools.partial(jax.jit, static_argnames=("relu",))
def _attr_adapter_forward(control_signal, attr_emb, w_hyper_aug, vec_pack,
                          wa_list, *, relu):
    B = control_signal.shape[0]
    A = attr_emb.shape[1]
    N = B * A
    N_pad = ((N + 7) // 8) * 8            # sublane-align the flat row count
    compute_dtype = w_hyper_aug.dtype
    hidden = tuple(int(w.shape[1]) for w in wa_list)
    offsets = tuple(int(sum(hidden[:i])) for i in range(len(hidden)))
    h_last = hidden[-1]

    # Layout plumbing (fused under jit, not eager dispatches):
    #  * attr^T tiled over batch (exactly the module's .repeat(B, 1, 1)),
    #  * control signal augmented with a ones column and repeated per
    #    attribute row so the kernel never reshapes/broadcasts,
    #  * zero-pad rows up to N_pad (padding sliced off after the kernel;
    #    LN over zero rows is finite, so no NaN contamination).
    attr_rows = jnp.tile(attr_emb.T, (B, 1)).astype(compute_dtype)      # (N, D_in)
    ctrl_aug = jnp.concatenate(
        [control_signal, jnp.ones((B, 1), control_signal.dtype)], axis=1)
    ctrl_rows = jnp.repeat(ctrl_aug, A, axis=0).astype(compute_dtype)    # (N, C+1)
    if N_pad != N:
        attr_rows = jnp.pad(attr_rows, ((0, N_pad - N), (0, 0)))
        ctrl_rows = jnp.pad(ctrl_rows, ((0, N_pad - N), (0, 0)))

    kernel = _make_attr_adapter_kernel(hidden, offsets, final_relu=relu)
    out2d = pl.pallas_call(
        kernel,
        out_shape=jax.ShapeDtypeStruct((N_pad, h_last), jnp.float32),
        compiler_params=pltpu.CompilerParams(vmem_limit_bytes=32 * 1024 * 1024),
    )(ctrl_rows, attr_rows, w_hyper_aug, vec_pack, *wa_list)

    return out2d[:N].reshape(B, A, h_last)


def attr_adapter_forward(control_signal, attr_emb, packed):
    return _attr_adapter_forward(control_signal, attr_emb,
                                 packed["w_hyper_aug"], packed["vec_pack"],
                                 packed["wa_list"], relu=packed["relu"])


# ----------------------------------------------------------------------------
# Pure-JAX reference (mirrors the PyTorch module, eval mode)
# ----------------------------------------------------------------------------
def attr_adapter_reference(control_signal, attr_emb, params, hypernet_struct,
                           relu=True):
    keys = list(hypernet_struct.keys())
    L = len(keys)
    B = control_signal.shape[0]
    A = attr_emb.shape[1]
    x = jnp.broadcast_to(attr_emb.T[None], (B, A, attr_emb.shape[0]))
    for i, k in enumerate(keys):
        hw = control_signal @ params[f"hyper_{k}_w"].T + params[f"hyper_{k}_b"]
        x = x @ params[f"adapter_{i}_w"].T + params[f"adapter_{i}_b"]
        x = x * hw[:, None, :]
        if i < L - 1:
            mu = x.mean(-1, keepdims=True)
            var = ((x - mu) ** 2).mean(-1, keepdims=True)
            x = (x - mu) / jnp.sqrt(var + 1e-5)
            x = x * params[f"ln_{i}_g"] + params[f"ln_{i}_b"]
            x = jnp.maximum(x, 0.0)
    if relu:
        x = jnp.maximum(x, 0.0)
    return x


def init_params(key, input_dim, hypernet_struct):
    params = {}
    keys = list(hypernet_struct.keys())
    L = len(keys)
    incoming = input_dim
    for i, k in enumerate(keys):
        c, h = hypernet_struct[k]
        key, k1, k2, k3, k4 = jax.random.split(key, 5)
        params[f"hyper_{k}_w"] = 0.1 * jax.random.normal(k1, (h, c), jnp.float32)
        params[f"hyper_{k}_b"] = 0.1 * jax.random.normal(k2, (h,), jnp.float32)
        params[f"adapter_{i}_w"] = 0.1 * jax.random.normal(k3, (h, incoming), jnp.float32)
        params[f"adapter_{i}_b"] = 0.1 * jax.random.normal(k4, (h,), jnp.float32)
        if i < L - 1:
            params[f"ln_{i}_g"] = jnp.ones((h,), jnp.float32)
            params[f"ln_{i}_b"] = jnp.zeros((h,), jnp.float32)
        incoming = h
    return params


if __name__ == "__main__":
    B = 2            # batch
    C = 8            # control-signal dim
    INPUT_DIM = 16   # attr embedding dim (rows of torch attr_emb)
    NUM_ATTR = 8     # number of attributes (cols of torch attr_emb)
    hypernet_struct = {"gate0": [C, 32], "gate1": [C, 16]}

    root = jax.random.PRNGKey(0)
    k_ctrl, k_attr, k_par = jax.random.split(root, 3)
    control_signal = jax.random.normal(k_ctrl, (B, C), jnp.float32)
    attr_emb = jax.random.normal(k_attr, (INPUT_DIM, NUM_ATTR), jnp.float32)
    params = init_params(k_par, INPUT_DIM, hypernet_struct)

    ref = attr_adapter_reference(control_signal, attr_emb, params,
                                 hypernet_struct, relu=True)

    # f32 MXU operands: tight check against the pure-JAX reference.
    packed_f32 = prepare_attr_adapter_params(params, hypernet_struct,
                                             relu=True,
                                             compute_dtype=jnp.float32)
    out = attr_adapter_forward(control_signal, attr_emb, packed_f32)
    out = jax.block_until_ready(out)
    assert out.shape == (B, NUM_ATTR, hypernet_struct["gate1"][1])
    assert jnp.allclose(out, ref, atol=1e-4, rtol=1e-4)

    # bf16 MXU operands (v6e/v7x-friendly), f32 accumulation + f32 LN math.
    packed_bf16 = prepare_attr_adapter_params(params, hypernet_struct,
                                              relu=True,
                                              compute_dtype=jnp.bfloat16)
    out_bf16 = jax.block_until_ready(
        attr_adapter_forward(control_signal, attr_emb, packed_bf16))
    assert out_bf16.shape == out.shape
    assert jnp.allclose(out_bf16, ref, atol=5e-2, rtol=5e-2)

    print("KERNEL_OK")
</pallas_src>

<mosaic_0001>
module attributes {stable_mosaic.version = 11 : i64} {
  func.func @kernel(%arg0: memref<16x9xf32, #tpu.memory_space<vmem>>, %arg1: memref<16x16xf32, #tpu.memory_space<vmem>>, %arg2: memref<9x48xf32, #tpu.memory_space<vmem>>, %arg3: memref<4x32xf32, #tpu.memory_space<vmem>>, %arg4: memref<16x32xf32, #tpu.memory_space<vmem>>, %arg5: memref<32x16xf32, #tpu.memory_space<vmem>>, %arg6: memref<16x16xf32, #tpu.memory_space<vmem>>) attributes {dimension_semantics = [], scalar_prefetch = 0 : i64, scratch_operands = 0 : i64, tpu.core_type = #tpu.core_type<tc>} {
    %c0 = arith.constant 0 : index
    %c0_0 = arith.constant 0 : index
    %0 = vector.load %arg3[%c0, %c0_0] : memref<4x32xf32, #tpu.memory_space<vmem>>, vector<4x32xf32>
    %c0_1 = arith.constant 0 : index
    %c0_2 = arith.constant 0 : index
    %1 = vector.load %arg0[%c0_1, %c0_2] : memref<16x9xf32, #tpu.memory_space<vmem>>, vector<16x9xf32>
    %c0_3 = arith.constant 0 : index
    %c0_4 = arith.constant 0 : index
    %2 = vector.load %arg2[%c0_3, %c0_4] : memref<9x48xf32, #tpu.memory_space<vmem>>, vector<9x48xf32>
    %cst = arith.constant dense<0.000000e+00> : vector<16x48xf32>
    %3 = tpu.matmul %1, %2, %cst {dimension_numbers = #tpu.dot_dimension_numbers<[1], [0], [0], [1], [0, 0, 1, 1], [], []>} : vector<16x9xf32>, vector<9x48xf32>, vector<16x48xf32> -> vector<16x48xf32>
    %c0_5 = arith.constant 0 : index
    %c0_6 = arith.constant 0 : index
    %4 = vector.load %arg1[%c0_5, %c0_6] : memref<16x16xf32, #tpu.memory_space<vmem>>, vector<16x16xf32>
    %c0_7 = arith.constant 0 : index
    %c0_8 = arith.constant 0 : index
    %5 = vector.load %arg4[%c0_7, %c0_8] : memref<16x32xf32, #tpu.memory_space<vmem>>, vector<16x32xf32>
    %6 = vector.extract_strided_slice %0 {offsets = [0, 0], sizes = [1, 32], strides = [1, 1]} : vector<4x32xf32> to vector<1x32xf32>
    %cst_9 = arith.constant dense<0.000000e+00> : vector<16x32xf32>
    %7 = tpu.matmul %4, %5, %cst_9 {dimension_numbers = #tpu.dot_dimension_numbers<[1], [0], [0], [1], [0, 0, 1, 1], [], []>} : vector<16x16xf32>, vector<16x32xf32>, vector<16x32xf32> -> vector<16x32xf32>
    %8 = vector.broadcast %6 : vector<1x32xf32> to vector<16x32xf32>
    %9 = arith.addf %7, %8 : vector<16x32xf32>
    %10 = vector.extract_strided_slice %3 {offsets = [0, 0], sizes = [16, 32], strides = [1, 1]} : vector<16x48xf32> to vector<16x32xf32>
    %11 = arith.mulf %9, %10 : vector<16x32xf32>
    %12 = vector.extract_strided_slice %0 {offsets = [2, 0], sizes = [1, 32], strides = [1, 1]} : vector<4x32xf32> to vector<1x32xf32>
    %13 = vector.extract_strided_slice %0 {offsets = [3, 0], sizes = [1, 32], strides = [1, 1]} : vector<4x32xf32> to vector<1x32xf32>
    %cst_10 = arith.constant dense<0.000000e+00> : vector<16xf32>
    %14 = vector.multi_reduction <add>, %11, %cst_10 [1] : vector<16x32xf32> to vector<16xf32>
    %15 = vector.shape_cast %14 : vector<16xf32> to vector<16x1xf32>
    %cst_11 = arith.constant 3.125000e-02 : f32
    %16 = vector.broadcast %cst_11 : f32 to vector<16x1xf32>
    %17 = arith.mulf %15, %16 : vector<16x1xf32>
    %18 = arith.mulf %11, %11 : vector<16x32xf32>
    %cst_12 = arith.constant dense<0.000000e+00> : vector<16xf32>
    %19 = vector.multi_reduction <add>, %18, %cst_12 [1] : vector<16x32xf32> to vector<16xf32>
    %20 = vector.shape_cast %19 : vector<16xf32> to vector<16x1xf32>
    %cst_13 = arith.constant 3.125000e-02 : f32
    %21 = vector.broadcast %cst_13 : f32 to vector<16x1xf32>
    %22 = arith.mulf %20, %21 : vector<16x1xf32>
    %23 = arith.mulf %17, %17 : vector<16x1xf32>
    %24 = arith.subf %22, %23 : vector<16x1xf32>
    %25 = vector.broadcast %17 : vector<16x1xf32> to vector<16x32xf32>
    %26 = arith.subf %11, %25 : vector<16x32xf32>
    %cst_14 = arith.constant 9.99999974E-6 : f32
    %27 = vector.broadcast %cst_14 : f32 to vector<16x1xf32>
    %28 = arith.addf %24, %27 : vector<16x1xf32>
    %29 = math.rsqrt %28 : vector<16x1xf32>
    %30 = vector.broadcast %29 : vector<16x1xf32> to vector<16x32xf32>
    %31 = arith.mulf %26, %30 : vector<16x32xf32>
    %32 = vector.broadcast %12 : vector<1x32xf32> to vector<16x32xf32>
    %33 = arith.mulf %31, %32 : vector<16x32xf32>
    %34 = vector.broadcast %13 : vector<1x32xf32> to vector<16x32xf32>
    %35 = arith.addf %33, %34 : vector<16x32xf32>
    %cst_15 = arith.constant 0.000000e+00 : f32
    %36 = vector.broadcast %cst_15 : f32 to vector<16x32xf32>
    %37 = arith.maximumf %35, %36 : vector<16x32xf32>
    %c0_16 = arith.constant 0 : index
    %c0_17 = arith.constant 0 : index
    %38 = vector.load %arg5[%c0_16, %c0_17] : memref<32x16xf32, #tpu.memory_space<vmem>>, vector<32x16xf32>
    %39 = vector.extract_strided_slice %0 {offsets = [1, 0], sizes = [1, 16], strides = [1, 1]} : vector<4x32xf32> to vector<1x16xf32>
    %cst_18 = arith.constant dense<0.000000e+00> : vector<16x16xf32>
    %40 = tpu.matmul %37, %38, %cst_18 {dimension_numbers = #tpu.dot_dimension_numbers<[1], [0], [0], [1], [0, 0, 1, 1], [], []>} : vector<16x32xf32>, vector<32x16xf32>, vector<16x16xf32> -> vector<16x16xf32>
    %41 = vector.broadcast %39 : vector<1x16xf32> to vector<16x16xf32>
    %42 = arith.addf %40, %41 : vector<16x16xf32>
    %43 = vector.extract_strided_slice %3 {offsets = [0, 32], sizes = [16, 16], strides = [1, 1]} : vector<16x48xf32> to vector<16x16xf32>
    %44 = arith.mulf %42, %43 : vector<16x16xf32>
    %cst_19 = arith.constant 0.000000e+00 : f32
    %45 = vector.broadcast %cst_19 : f32 to vector<16x16xf32>
    %46 = arith.maximumf %44, %45 : vector<16x16xf32>
    %c0_20 = arith.constant 0 : index
    %c0_21 = arith.constant 0 : index
    %47 = vector.load %arg6[%c0_20, %c0_21] : memref<16x16xf32, #tpu.memory_space<vmem>>, vector<16x16xf32>
    tpu.vector_store %arg6[%c0_20, %c0_21], %46 {strides = array<i32>} : memref<16x16xf32, #tpu.memory_space<vmem>>, vector<16x16xf32>,
    return
  }
}

</mosaic_0001>

<llo_original>
// kernel: _attr_adapter_forward.1
$region0: #{_attr_adapter_forward.1}
  #allocation0 [shape = 'u32[]', space=smem, size = 0x4, offset = 0x4, fixed_abs, tag = 'smem constant byte address 0x4 - core index']
  #allocation1 [shape = 'u32[72,128]{1,0:T(1,128)}', space=vmem, size = 0x9000, scoped, tag = 'internal scratch']
  %s0 = inlined_call_operand.vmem [shape: f32[16,9], index: 0, kind: input, shape index: {}]
  %s1 = inlined_call_operand.vmem [shape: f32[16,16], index: 1, kind: input, shape index: {}]
  %s2 = inlined_call_operand.vmem [shape: f32[9,48], index: 2, kind: input, shape index: {}]
  %s3 = inlined_call_operand.vmem [shape: f32[4,32], index: 3, kind: input, shape index: {}]
  %s4 = inlined_call_operand.vmem [shape: f32[16,32], index: 4, kind: input, shape index: {}]
  %s5 = inlined_call_operand.vmem [shape: f32[32,16], index: 5, kind: input, shape index: {}]
  %s6 = inlined_call_operand.hbm [shape: f32[16,16], index: 6, kind: output, shape index: {}]
  %s7 = sld [smem:[#allocation0]]
  $region34: #{_attr_adapter_forward.1} parent=0
    _
  %s9 = ssub.s32 1, %s7
  %s10 = scalar_select 0, %s9, %s7
  $region1: #{_attr_adapter_forward.1} parent=0
    #allocation2 [shape = 'u8[8192]{0}', space=vmem, size = 0x2000, scoped, tag = 'output window, operand 0, single buffered']
    #allocation3 [shape = 's32[1]{0}', space=sflag, size = 0x4, scoped, tag = 'scoped memory for _attr_adapter_forward.1']
    %11 = vsyncpa [#allocation3], 0
    // Predicated region
    $region2: #{_attr_adapter_forward.1} parent=1 // pred_check
      _
    $region3: #{_attr_adapter_forward.1} parent=1 // pred_check_branch
      %13 = sbr.rel (0) target = $region5
    $region4: #{_attr_adapter_forward.1} parent=1 // pred_region
      _
    $region5: #{_attr_adapter_forward.1} parent=1 // pred_fallthru
      _
    // Predicated region
    $region6: #{_attr_adapter_forward.1} parent=1 // pred_check
      _
    $region7: #{_attr_adapter_forward.1} parent=1 // pred_check_branch
      %15 = sbr.rel (0) target = $region9
    $region8: #{_attr_adapter_forward.1} parent=1 // pred_region
      _
    $region9: #{_attr_adapter_forward.1} parent=1 // pred_fallthru
      _
    // Predicated region
    $region10: #{_attr_adapter_forward.1} parent=1 // pred_check
      _
    $region11: #{_attr_adapter_forward.1} parent=1 // pred_check_branch
      %17 = sbr.rel (0) target = $region13
    $region12: #{_attr_adapter_forward.1} parent=1 // pred_region
      _
    $region13: #{_attr_adapter_forward.1} parent=1 // pred_fallthru
      _
    // Predicated region
    $region14: #{_attr_adapter_forward.1} parent=1 // pred_check
      _
    $region15: #{_attr_adapter_forward.1} parent=1 // pred_check_branch
      %19 = sbr.rel (0) target = $region17
    $region16: #{_attr_adapter_forward.1} parent=1 // pred_region
      _
    $region17: #{_attr_adapter_forward.1} parent=1 // pred_fallthru
      _
    // Predicated region
    $region18: #{_attr_adapter_forward.1} parent=1 // pred_check
      _
    $region19: #{_attr_adapter_forward.1} parent=1 // pred_check_branch
      %21 = sbr.rel (0) target = $region21
    $region20: #{_attr_adapter_forward.1} parent=1 // pred_region
      _
    $region21: #{_attr_adapter_forward.1} parent=1 // pred_fallthru
      _
    // Predicated region
    $region22: #{_attr_adapter_forward.1} parent=1 // pred_check
      _
    $region23: #{_attr_adapter_forward.1} parent=1 // pred_check_branch
      %23 = sbr.rel (0) target = $region25
    $region24: #{_attr_adapter_forward.1} parent=1 // pred_region
      _
    $region25: #{_attr_adapter_forward.1} parent=1 // pred_fallthru
      _
    %v24 = vld [vmem:[%s3] sm:$0xf]
    %v25 = vld [vmem:[%s0] sm:$0xff]
    %v26 = vld [vmem:[%s0 + $0x8] sm:$0xff]
    %v27 = vld [vmem:[%s2] sm:$0xff]
    %v28 = vld [vmem:[%s2 + $0x8] sm:$0x1]
    %vm29 = vcmask 72704
    %v31 = vsel %vm29, %v25, 0
    %v34 = vsel %vm29, %v26, 0
    %vm36 = vcmask 1040384
    %v38 = vsel %vm36, %v28, 0
    %40 = vmatpush.msra.mxu0 0.0
    %41 = vmatpush.msra.mxu0 0.0
    %42 = vmatpush.msra.mxu0 0.0
    %43 = vmatpush.msra.mxu0 0.0
    %44 = vmatpush.msra.mxu0 0.0
    %45 = vmatpush.msra.mxu0 0.0
    %46 = vmatpush.msra.mxu0 0.0
    %47 = vmatpush.msra.mxu0 0.0
    %48 = vmatpush.msra.mxu0 0.0
    %49 = vmatpush.msra.mxu0 0.0
    %50 = vmatpush.msra.mxu0 0.0
    %51 = vmatpush.msra.mxu0 0.0
    %52 = vmatpush.msra.mxu0 0.0
    %53 = vmatpush.msra.mxu0 0.0
    %54 = vmatpush.msra.mxu0 %v38
    %55 = vmatpush.msra.mxu0 %v27
    %56 = vmatmul.f32.gmra.mxu0 %v31
    %v57 = vpop.f32.mrf.mxu0
    %v58 = vadd.f32 0.0, %v57
    %59 = vmatmul.f32.gmra.mxu0 %v34
    %v60 = vpop.f32.mrf.mxu0
    %v61 = vadd.f32 0.0, %v60
    %62 = vdwg.mxu0
    %v63 = vld [vmem:[%s1] sm:$0xff]
    %v64 = vld [vmem:[%s1 + $0x8] sm:$0xff]
    %v65 = vld [vmem:[%s4] sm:$0xff]
    %v66 = vld [vmem:[%s4 + $0x8] sm:$0xff]
    %v67 = vperm.slane %v24, 0
    %vm68 = vcmask 130048
    %v70 = vsel %vm68, %v63, 0
    %v73 = vsel %vm68, %v64, 0
    %75 = vmatpush.msra.mxu0 0.0
    %76 = vmatpush.msra.mxu0 0.0
    %77 = vmatpush.msra.mxu0 0.0
    %78 = vmatpush.msra.mxu0 0.0
    %79 = vmatpush.msra.mxu0 0.0
    %80 = vmatpush.msra.mxu0 0.0
    %81 = vmatpush.msra.mxu0 0.0
    %82 = vmatpush.msra.mxu0 0.0
    %83 = vmatpush.msra.mxu0 0.0
    %84 = vmatpush.msra.mxu0 0.0
    %85 = vmatpush.msra.mxu0 0.0
    %86 = vmatpush.msra.mxu0 0.0
    %87 = vmatpush.msra.mxu0 0.0
    %88 = vmatpush.msra.mxu0 0.0
    %89 = vmatpush.msra.mxu0 %v66
    %90 = vmatpush.msra.mxu0 %v65
    %91 = vmatmul.f32.gmra.mxu0 %v70
    %v92 = vpop.f32.mrf.mxu0
    %v93 = vadd.f32 %v67, %v92
    %94 = vmatmul.f32.gmra.mxu0 %v73
    %v95 = vpop.f32.mrf.mxu0
    %v96 = vadd.f32 %v67, %v95
    %97 = vdwg.mxu0
    %v98 = vmul.f32 %v93, %v58
    %v99 = vmul.f32 %v96, %v61
    %vm100 = vcmask 261120
    %v101 = vsel %vm100, %v98, 0.0
    %102 = vadd.xlane.f32.xlu0 %v101
    %v103 = vpop.xlane.xlu0 %102
    %v104 = vsel %vm100, %v99, 0.0
    %105 = vadd.xlane.f32.xlu0 %v104
    %v106 = vpop.xlane.xlu0 %105
    %v107 = vmul.f32 %v103, 0.03125
    %v108 = vmul.f32 %v106, 0.03125
    %v109 = vmul.f32 %v98, %v98
    %v110 = vmul.f32 %v99, %v99
    %v111 = vsel %vm100, %v109, 0.0
    %112 = vadd.xlane.f32.xlu0 %v111
    %v113 = vpop.xlane.xlu0 %112
    %v114 = vsel %vm100, %v110, 0.0
    %115 = vadd.xlane.f32.xlu0 %v114
    %v116 = vpop.xlane.xlu0 %115
    %v117 = vmul.f32 %v113, 0.03125
    %v118 = vmul.f32 %v116, 0.03125
    %v119 = vmul.f32 %v107, %v107
    %v120 = vmul.f32 %v108, %v108
    %v121 = vsub.f32 %v117, %v119
    %v122 = vsub.f32 %v118, %v120
    %v123 = vsub.f32 %v98, %v107
    %v124 = vsub.f32 %v99, %v108
    %v125 = vadd.f32 %v121, 1e-05
    %v126 = vadd.f32 %v122, 1e-05
    %v127 = vrsqrt.pop %v125
    %v128 = vmul.f32 %v127, %v125
    %v129 = vmul.f32 %v128, %v127
    %v130 = vmul.f32 0.5, %v129
    %v131 = vsub.f32 1.5, %v130
    %v132 = vmul.f32 %v127, %v131
    %vm133 = vweird.f32 %v125
    %vm134 = vweird.f32 %v127
    %vm135 = vmor %vm133, %vm134
    %v136 = vsel %vm135, %v127, %v132
    %v137 = vrsqrt.pop %v126
    %v138 = vmul.f32 %v137, %v126
    %v139 = vmul.f32 %v138, %v137
    %v140 = vmul.f32 0.5, %v139
    %v141 = vsub.f32 1.5, %v140
    %v142 = vmul.f32 %v137, %v141
    %vm143 = vweird.f32 %v126
    %vm144 = vweird.f32 %v137
    %vm145 = vmor %vm143, %vm144
    %v146 = vsel %vm145, %v137, %v142
    %v147 = vmul.f32 %v123, %v136
    %v148 = vmul.f32 %v124, %v146
    %v149 = vperm.slane %v24, 2
    %v150 = vmul.f32 %v147, %v149
    %v151 = vmul.f32 %v148, %v149
    %v152 = vperm.slane %v24, 3
    %v153 = vadd.f32 %v150, %v152
    %v154 = vadd.f32 %v151, %v152
    %v155 = vmax.f32 %v153, 0.0
    %v156 = vmax.f32 %v154, 0.0
    %v157 = vld [vmem:[%s5] sm:$0xff]
    %v158 = vld [vmem:[%s5 + $0x8] sm:$0xff]
    %v159 = vld [vmem:[%s5 + $0x10] sm:$0xff]
    %v160 = vld [vmem:[%s5 + $0x18] sm:$0xff]
    %v161 = vperm.slane %v24, 1
    %v163 = vsel %vm100, %v155, 0
    %v166 = vsel %vm100, %v156, 0
    %168 = vmatpush.msra.mxu0 0.0
    %169 = vmatpush.msra.mxu0 0.0
    %170 = vmatpush.msra.mxu0 0.0
    %171 = vmatpush.msra.mxu0 0.0
    %172 = vmatpush.msra.mxu0 0.0
    %173 = vmatpush.msra.mxu0 0.0
    %174 = vmatpush.msra.mxu0 0.0
    %175 = vmatpush.msra.mxu0 0.0
    %176 = vmatpush.msra.mxu0 0.0
    %177 = vmatpush.msra.mxu0 0.0
    %178 = vmatpush.msra.mxu0 0.0
    %179 = vmatpush.msra.mxu0 0.0
    %180 = vmatpush.msra.mxu0 %v160
    %181 = vmatpush.msra.mxu0 %v159
    %182 = vmatpush.msra.mxu0 %v158
    %183 = vmatpush.msra.mxu0 %v157
    %184 = vmatmul.f32.gmra.mxu0 %v163
    %v185 = vpop.f32.mrf.mxu0
    %v186 = vadd.f32 %v161, %v185
    %187 = vmatmul.f32.gmra.mxu0 %v166
    %v188 = vpop.f32.mrf.mxu0
    %v189 = vadd.f32 %v161, %v188
    %190 = vdwg.mxu0
    %193 = vrot.lane.b32.xlu0 %v58, 96
    %v194 = vpop.permute.xlu0 %193
    %195 = vrot.lane.b32.xlu0 %v61, 96
    %v196 = vpop.permute.xlu0 %195
    %v199 = vmul.f32 %v186, %v194
    %v200 = vmul.f32 %v189, %v196
    %v201 = vmax.f32 %v199, 0.0
    %v202 = vmax.f32 %v200, 0.0
    %203 = vst.msk [vmem:[#allocation2] sm:$0xff] %vm68, %v201
    %204 = vst.msk [vmem:[#allocation2 + $0x8] sm:$0xff] %vm68, %v202
    // Predicated region
    $region26: #{_attr_adapter_forward.1} parent=1 // pred_check
      _
    $region27: #{_attr_adapter_forward.1} parent=1 // pred_check_branch
      %206 = sbr.rel (0) target = $region29
    $region28: #{_attr_adapter_forward.1} parent=1 // pred_region
      %208 = vsyncadd [#allocation3], 0
      %s209 = sshll.u32 [#allocation2], 4
      %s210 = int_to_ptr.vmem [resolvable:$true] %s209
      %s211 = sshll.u32 %s6, 4
      %s212 = int_to_ptr.hbm [resolvable:$true] %s211
      %217 = dma.vmem_to_hbm [thread:$0]  %s210, 256, %s212, [#allocation3], 128, 128, 8
    $region29: #{_attr_adapter_forward.1} parent=1 // pred_fallthru
      _
    // Predicated region
    $region30: #{_attr_adapter_forward.1} parent=1 // pred_check
      _
    $region31: #{_attr_adapter_forward.1} parent=1 // pred_check_branch
      %219 = sbr.rel (0) target = $region33
    $region32: #{_attr_adapter_forward.1} parent=1 // pred_region
      %221 = dma.done [#allocation3], 256
    $region33: #{_attr_adapter_forward.1} parent=1 // pred_fallthru
      _
    %222 = vsyncpa [#allocation3], 1

</llo_original>
